<compile_context>
chip_gen: v7x
topology: tpu7x:2x2x1
jax: 0.10.0
libtpu: 0.0.40
codegen_flags: <defaults>
</compile_context>

<pallas_src>
import functools

import jax
import jax.numpy as jnp
from jax import lax
from jax.experimental import pallas as pl
from jax.experimental.pallas import tpu as pltpu


# ----------------------------- router kernel --------------------------------

def _router_kernel(x_ref, wr_ref, br_ref, g_ref, *, n_experts):
    """Top-2 gating: softmax over the two largest router logits, 0 elsewhere."""
    rl = jnp.dot(x_ref[...], wr_ref[...],
                 preferred_element_type=jnp.float32) + br_ref[...]      # (TM, E) f32
    ids = lax.broadcasted_iota(jnp.int32, rl.shape, 1)
    neg = jnp.float32(-1e30)

    m1 = jnp.max(rl, axis=-1, keepdims=True)
    i1 = jnp.min(jnp.where(rl == m1, ids, n_experts), axis=-1, keepdims=True)
    rl2 = jnp.where(ids == i1, neg, rl)
    m2 = jnp.max(rl2, axis=-1, keepdims=True)
    i2 = jnp.min(jnp.where(rl2 == m2, ids, n_experts), axis=-1, keepdims=True)

    e21 = jnp.exp(m2 - m1)                 # exp(l2 - l1) <= 1
    inv_den = 1.0 / (1.0 + e21)            # tiny (TM,1) epilogue, keep exact
    g_ref[...] = jnp.where(ids == i1, inv_den,
                           jnp.where(ids == i2, e21 * inv_den, 0.0))


# --------------------------- expert FFN kernel -------------------------------

def _expert_ffn_kernel(flags_ref,                       # SMEM (n_tiles*E,) int32
                       x_ref, gates_ref,                # (TM, D) bf16, (TM, E) f32
                       w1_ref, b1_ref, w2_ref, b2_ref,  # (D,TH) (1,TH) (TH,D) (1,D)
                       o_ref,                           # (TM, D) f32
                       acc_ref, gcol_ref):              # VMEM (TM, D), (TM, 1) f32
    i = pl.program_id(0)
    e = pl.program_id(1)
    hk = pl.program_id(2)
    n_e = pl.num_programs(1)
    n_h = pl.num_programs(2)

    @pl.when(jnp.logical_and(e == 0, hk == 0))
    def _init():
        acc_ref[...] = jnp.zeros_like(acc_ref)

    # Skip experts that no token in this row tile is routed to.
    @pl.when(flags_ref[i * n_e + e] > 0)
    def _compute():
        # Per-expert gate column + gate-scaled second-linear bias: once per
        # (row-tile, expert), not per hidden tile.
        @pl.when(hk == 0)
        def _gate_and_bias():
            gates = gates_ref[...]                                     # (TM, E)
            ids = lax.broadcasted_iota(jnp.int32, gates.shape, 1)
            gcol_ref[...] = jnp.sum(jnp.where(ids == e, gates, 0.0),
                                    axis=-1, keepdims=True)            # (TM, 1)
            acc_ref[...] += gcol_ref[...] * b2_ref[...]

        g = gcol_ref[...]                                              # (TM, 1)
        h = jnp.dot(x_ref[...], w1_ref[...],
                    preferred_element_type=jnp.float32) + b1_ref[...]  # (TM, TH)
        # SiLU: x * sigmoid(x); reciprocal goes to the EUP slot.
        h = h * pl.reciprocal(1.0 + jnp.exp(-h), approx=True)
        acc_ref[...] += g * jnp.dot(h.astype(x_ref.dtype), w2_ref[...],
                                    preferred_element_type=jnp.float32)

    @pl.when(jnp.logical_and(e == n_e - 1, hk == n_h - 1))
    def _finalize():
        o_ref[...] = acc_ref[...].astype(o_ref.dtype)


# ------------------------------- wrapper --------------------------------------

def moe_feedforward(x, params, *, block_rows=128, block_hidden=512):
    """x: (B, T, D) float32 -> (B, T, D) float32."""
    B, T, D = x.shape
    E = params["wr"].shape[-1]
    H4 = params["w1"].shape[-1]

    N = B * T
    TM = max(8, min(block_rows, ((N + 7) // 8) * 8))
    n_tiles = -(-N // TM)
    N_pad = n_tiles * TM

    xf = x.reshape(N, D)
    if N_pad != N:
        xf = jnp.pad(xf, ((0, N_pad - N), (0, 0)))
    x_bf = xf.astype(jnp.bfloat16)

    TH = block_hidden
    if TH >= H4 or H4 % TH != 0 or TH % 128 != 0:
        TH = H4
    n_h = H4 // TH

    # ---- kernel 1: router + top-2 gating -> dense gate matrix ----
    gates = pl.pallas_call(
        functools.partial(_router_kernel, n_experts=E),
        out_shape=jax.ShapeDtypeStruct((N_pad, E), jnp.float32),
        grid_spec=pltpu.PrefetchScalarGridSpec(
            num_scalar_prefetch=0,
            grid=(n_tiles,),
            in_specs=[pl.BlockSpec((TM, D), lambda i: (i, 0)),
                      pl.BlockSpec((D, E), lambda i: (0, 0)),
                      pl.BlockSpec((1, E), lambda i: (0, 0))],
            out_specs=pl.BlockSpec((TM, E), lambda i: (i, 0))),
        compiler_params=pltpu.CompilerParams(dimension_semantics=("parallel",)),
    )(x_bf, params["wr"], params["br"])

    # per-(row-tile, expert) routing flags, flattened to 1-D for cheap SMEM
    # scalar prefetch (2-D SMEM pads to [8,128] multiples).
    flags = ((gates.reshape(n_tiles, TM, E) > 0.0)
             .any(axis=1).astype(jnp.int32).reshape(-1))

    # ---- kernel 2: expert FFN with streamed expert/hidden weight tiles ----
    out = pl.pallas_call(
        _expert_ffn_kernel,
        out_shape=jax.ShapeDtypeStruct((N_pad, D), jnp.float32),
        grid_spec=pltpu.PrefetchScalarGridSpec(
            num_scalar_prefetch=1,
            grid=(n_tiles, E, n_h),
            in_specs=[
                pl.BlockSpec((TM, D), lambda i, e, hk, fl: (i, 0)),            # x
                pl.BlockSpec((TM, E), lambda i, e, hk, fl: (i, 0)),            # gates
                pl.BlockSpec((None, D, TH), lambda i, e, hk, fl: (e, 0, hk)),  # w1
                pl.BlockSpec((None, 1, TH), lambda i, e, hk, fl: (e, 0, hk)),  # b1
                pl.BlockSpec((None, TH, D), lambda i, e, hk, fl: (e, hk, 0)),  # w2
                pl.BlockSpec((None, 1, D), lambda i, e, hk, fl: (e, 0, 0)),    # b2
            ],
            out_specs=pl.BlockSpec((TM, D), lambda i, e, hk, fl: (i, 0)),
            scratch_shapes=[pltpu.VMEM((TM, D), jnp.float32),
                            pltpu.VMEM((TM, 1), jnp.float32)]),
        compiler_params=pltpu.CompilerParams(
            dimension_semantics=("parallel", "arbitrary", "arbitrary"),
            vmem_limit_bytes=64 * 1024 * 1024),
    )(flags, x_bf, gates, params["w1"], params["b1"], params["w2"], params["b2"])

    return out[:N].reshape(B, T, D)


# ------------------------------ params / reference ----------------------------

def init_params(key, *, d_model, num_experts):
    D, E, H4 = d_model, num_experts, 4 * d_model
    ks = jax.random.split(key, 6)
    s = 0.05
    return dict(
        wr=(s * jax.random.normal(ks[0], (D, E), jnp.float32)).astype(jnp.bfloat16),
        br=s * jax.random.normal(ks[1], (1, E), jnp.float32),
        w1=(s * jax.random.normal(ks[2], (E, D, H4), jnp.float32)).astype(jnp.bfloat16),
        b1=s * jax.random.normal(ks[3], (E, 1, H4), jnp.float32),
        w2=(s * jax.random.normal(ks[4], (E, H4, D), jnp.float32)).astype(jnp.bfloat16),
        b2=s * jax.random.normal(ks[5], (E, 1, D), jnp.float32),
    )


def moe_reference(x, params):
    """Pure-JAX reference mirroring the kernel's bf16 storage / f32 math."""
    B, T, D = x.shape
    E = params["wr"].shape[-1]
    xb = x.reshape(-1, D).astype(jnp.bfloat16).astype(jnp.float32)
    wr = params["wr"].astype(jnp.float32)
    rl = xb @ wr + params["br"]
    vals, idxs = lax.top_k(rl, 2)
    gvals = jax.nn.softmax(vals, axis=-1)
    dense = jnp.zeros_like(rl).at[jnp.arange(rl.shape[0])[:, None], idxs].add(gvals)
    out = jnp.zeros((rl.shape[0], D), jnp.float32)
    for e in range(E):
        w1 = params["w1"][e].astype(jnp.float32)
        w2 = params["w2"][e].astype(jnp.float32)
        h = xb @ w1 + params["b1"][e]
        h = h * jax.nn.sigmoid(h)
        h = h.astype(jnp.bfloat16).astype(jnp.float32)
        out = out + dense[:, e:e + 1] * (h @ w2 + params["b2"][e])
    return out.reshape(B, T, D)


# ---------------------------------- main ---------------------------------------

if __name__ == "__main__":
    B, T, D, E = 2, 16, 128, 4          # d_model=128 (lane-dense), 4 experts, top-2
    key = jax.random.PRNGKey(0)
    kp, kx = jax.random.split(key)
    params = init_params(kp, d_model=D, num_experts=E)
    x = 0.5 * jax.random.normal(kx, (B, T, D), jnp.float32)

    y = moe_feedforward(x, params, block_rows=16, block_hidden=256)
    y = jax.block_until_ready(y)

    assert y.shape == (B, T, D), y.shape
    assert bool(jnp.all(jnp.isfinite(y)))

    y_ref = moe_reference(x, params)
    assert bool(jnp.allclose(y, y_ref, rtol=5e-2, atol=1e-2)), \
        float(jnp.max(jnp.abs(y - y_ref)))

    print("KERNEL_OK")
</pallas_src>

<mosaic_0001>
module attributes {stable_mosaic.version = 11 : i64} {
  func.func @_router_kernel(%arg0: i32, %arg1: memref<16x128xbf16, #tpu.memory_space<vmem>>, %arg2: memref<128x4xbf16, #tpu.memory_space<vmem>>, %arg3: memref<1x4xf32, #tpu.memory_space<vmem>>, %arg4: memref<16x4xf32, #tpu.memory_space<vmem>>) attributes {dimension_semantics = [#tpu.dimension_semantics<parallel>], iteration_bounds = array<i64: 2>, scalar_prefetch = 0 : i64, scratch_operands = 0 : i64, tpu.core_type = #tpu.core_type<tc>, window_params = [{transform_indices = @transform_0, window_bounds = array<i64: 16, 128>}, {pipeline_mode = #tpu.pipeline_mode<synchronous>, transform_indices = @transform_1, window_bounds = array<i64: 128, 4>}, {pipeline_mode = #tpu.pipeline_mode<synchronous>, transform_indices = @transform_2, window_bounds = array<i64: 1, 4>}, {transform_indices = @transform_3, window_bounds = array<i64: 16, 4>}]} {
    %c0 = arith.constant 0 : index
    %c0_0 = arith.constant 0 : index
    %0 = vector.load %arg1[%c0, %c0_0] : memref<16x128xbf16, #tpu.memory_space<vmem>>, vector<16x128xbf16>
    %c0_1 = arith.constant 0 : index
    %c0_2 = arith.constant 0 : index
    %1 = vector.load %arg2[%c0_1, %c0_2] : memref<128x4xbf16, #tpu.memory_space<vmem>>, vector<128x4xbf16>
    %cst = arith.constant dense<0.000000e+00> : vector<16x4xf32>
    %2 = tpu.matmul %0, %1, %cst {dimension_numbers = #tpu.dot_dimension_numbers<[1], [0], [0], [1], [0, 0, 1, 1], [], []>} : vector<16x128xbf16>, vector<128x4xbf16>, vector<16x4xf32> -> vector<16x4xf32>
    %c0_3 = arith.constant 0 : index
    %c0_4 = arith.constant 0 : index
    %3 = vector.load %arg3[%c0_3, %c0_4] : memref<1x4xf32, #tpu.memory_space<vmem>>, vector<1x4xf32>
    %4 = vector.broadcast %3 : vector<1x4xf32> to vector<16x4xf32>
    %5 = arith.addf %2, %4 : vector<16x4xf32>
    %6 = tpu.iota {dimensions = array<i32: 1>} : vector<16x4xi32>
    %cst_5 = arith.constant dense<0xFF800000> : vector<16xf32>
    %7 = vector.multi_reduction <maximumf>, %5, %cst_5 [1] : vector<16x4xf32> to vector<16xf32>
    %8 = vector.shape_cast %7 : vector<16xf32> to vector<16x1xf32>
    %9 = vector.broadcast %8 : vector<16x1xf32> to vector<16x4xf32>
    %10 = arith.cmpf oeq, %5, %9 : vector<16x4xf32>
    %c4_i32 = arith.constant 4 : i32
    %11 = vector.broadcast %c4_i32 : i32 to vector<16x4xi32>
    %12 = arith.select %10, %6, %11 : vector<16x4xi1>, vector<16x4xi32>
    %cst_6 = arith.constant dense<2147483647> : vector<16xi32>
    %13 = vector.multi_reduction <minsi>, %12, %cst_6 [1] : vector<16x4xi32> to vector<16xi32>
    %14 = vector.shape_cast %13 : vector<16xi32> to vector<16x1xi32>
    %15 = vector.broadcast %14 : vector<16x1xi32> to vector<16x4xi32>
    %16 = arith.cmpi eq, %6, %15 : vector<16x4xi32>
    %cst_7 = arith.constant -1.000000e+30 : f32
    %17 = vector.broadcast %cst_7 : f32 to vector<16x4xf32>
    %18 = arith.select %16, %17, %5 : vector<16x4xi1>, vector<16x4xf32>
    %cst_8 = arith.constant dense<0xFF800000> : vector<16xf32>
    %19 = vector.multi_reduction <maximumf>, %18, %cst_8 [1] : vector<16x4xf32> to vector<16xf32>
    %20 = vector.shape_cast %19 : vector<16xf32> to vector<16x1xf32>
    %21 = vector.broadcast %20 : vector<16x1xf32> to vector<16x4xf32>
    %22 = arith.cmpf oeq, %18, %21 : vector<16x4xf32>
    %c4_i32_9 = arith.constant 4 : i32
    %23 = vector.broadcast %c4_i32_9 : i32 to vector<16x4xi32>
    %24 = arith.select %22, %6, %23 : vector<16x4xi1>, vector<16x4xi32>
    %cst_10 = arith.constant dense<2147483647> : vector<16xi32>
    %25 = vector.multi_reduction <minsi>, %24, %cst_10 [1] : vector<16x4xi32> to vector<16xi32>
    %26 = vector.shape_cast %25 : vector<16xi32> to vector<16x1xi32>
    %27 = arith.subf %20, %8 : vector<16x1xf32>
    %28 = math.exp %27 : vector<16x1xf32>
    %cst_11 = arith.constant 1.000000e+00 : f32
    %29 = vector.broadcast %cst_11 : f32 to vector<16x1xf32>
    %30 = arith.addf %29, %28 : vector<16x1xf32>
    %cst_12 = arith.constant 1.000000e+00 : f32
    %31 = vector.broadcast %cst_12 : f32 to vector<16x1xf32>
    %32 = arith.divf %31, %30 : vector<16x1xf32>
    %33 = vector.broadcast %14 : vector<16x1xi32> to vector<16x4xi32>
    %34 = arith.cmpi eq, %6, %33 : vector<16x4xi32>
    %35 = vector.broadcast %26 : vector<16x1xi32> to vector<16x4xi32>
    %36 = arith.cmpi eq, %6, %35 : vector<16x4xi32>
    %37 = arith.mulf %28, %32 : vector<16x1xf32>
    %cst_13 = arith.constant 0.000000e+00 : f32
    %38 = vector.shape_cast %37 : vector<16x1xf32> to vector<16x1xf32>
    %39 = vector.broadcast %38 : vector<16x1xf32> to vector<16x4xf32>
    %40 = vector.broadcast %cst_13 : f32 to vector<16x4xf32>
    %41 = arith.select %36, %39, %40 : vector<16x4xi1>, vector<16x4xf32>
    %42 = vector.shape_cast %32 : vector<16x1xf32> to vector<16x1xf32>
    %43 = vector.broadcast %42 : vector<16x1xf32> to vector<16x4xf32>
    %44 = arith.select %34, %43, %41 : vector<16x4xi1>, vector<16x4xf32>
    %c0_14 = arith.constant 0 : index
    %c0_15 = arith.constant 0 : index
    %45 = vector.load %arg4[%c0_14, %c0_15] : memref<16x4xf32, #tpu.memory_space<vmem>>, vector<16x4xf32>
    tpu.vector_store %arg4[%c0_14, %c0_15], %44 {strides = array<i32>} : memref<16x4xf32, #tpu.memory_space<vmem>>, vector<16x4xf32>,
    return
  }
  func.func @transform_0(%arg0: i32) -> (i32, i32) {
    %c0_i32 = arith.constant 0 : i32
    %c0_i32_0 = arith.constant 0 : i32
    return %arg0, %c0_i32 : i32, i32
  }
  func.func @transform_1(%arg0: i32) -> (i32, i32) {
    %c0_i32 = arith.constant 0 : i32
    %c0_i32_0 = arith.constant 0 : i32
    %c0_i32_1 = arith.constant 0 : i32
    return %c0_i32, %c0_i32_0 : i32, i32
  }
  func.func @transform_2(%arg0: i32) -> (i32, i32) {
    %c0_i32 = arith.constant 0 : i32
    %c0_i32_0 = arith.constant 0 : i32
    %c0_i32_1 = arith.constant 0 : i32
    return %c0_i32, %c0_i32_0 : i32, i32
  }
  func.func @transform_3(%arg0: i32) -> (i32, i32) {
    %c0_i32 = arith.constant 0 : i32
    %c0_i32_0 = arith.constant 0 : i32
    return %arg0, %c0_i32 : i32, i32
  }
}

</mosaic_0001>

<llo_original>
// kernel: tpu_custom_call.1
$region0: #{tpu_custom_call.1}
  #allocation0 [shape = 'u32[]', space=smem, size = 0x4, offset = 0x4, fixed_abs, tag = 'smem constant byte address 0x4 - core index']
  #allocation1 [shape = 'u32[144,128]{1,0:T(1,128)}', space=vmem, size = 0x12000, scoped, tag = 'internal scratch']
  %s0 = inlined_call_operand.vmem [shape: bf16[32,128], index: 0, kind: input, shape index: {}]
  %s1 = inlined_call_operand.vmem [shape: bf16[128,4], index: 1, kind: input, shape index: {}]
  %s2 = inlined_call_operand.vmem [shape: f32[1,4], index: 2, kind: input, shape index: {}]
  %s3 = inlined_call_operand.vmem [shape: f32[32,4], index: 3, kind: output, shape index: {}]
  %s4 = sld [smem:[#allocation0]]
  $region45: #{tpu_custom_call.1} parent=0
    _
  %s6 = ssub.s32 1, %s4
  %s7 = scalar_select 0, %s6, %s4
  loop: start=0, step=1, limit=4
  $region2: #{tpu_custom_call.1} parent=0 // loop_pre_header
    _
  $region3: #{tpu_custom_call.1} parent=0 // loop_header
    %s9 = sphi 0, %s13
    %p10 = scmp.ge.s32.totalorder %s9, 4
    %s19 = sphi 0, %s21
    %s22 = sphi 0, %s19
    %s23 = sphi 0, %s22
    %s39 = sphi 0, %s23
    %s43 = sphi 0, %s43
    %s45 = sphi 0, %s43
    %s46 = sphi 0, %s45
    %s60 = sphi 0, %s46
    %s64 = sphi 0, %s64
    %s66 = sphi 0, %s64
    %s67 = sphi 0, %s66
    %s81 = sphi 0, %s67
    %s87 = sphi 0, %s89
    %s90 = sphi 0, %s87
    %s91 = sphi 0, %s90
    %s107 = sphi 0, %s91
  $region4: #{tpu_custom_call.1} parent=0 // loop_header_branch
    %12 = sbr.rel (%p10) target = $region8
  $region5: #{tpu_custom_call.1} parent=0 // loop_body
    %s14 = ssub.s32 %s9, 1
    %s15 = ssub.s32 %s9, 2
    %s16 = sadd.s32 %s9, 1
    %s17 = ssub.s32 %s9, %s16
    %p18 = scmp.eq.s32.totalorder %s17, 0
    %s20 = sadd.s32 %s19, 1
    %s21 = scalar_select %p18, %s19, %s20
    %p24 = pneg %p18
    %p25 = scmp.eq.s32.totalorder %s9, 1
    %p26 = por %p24, %p25
    %p27 = scmp.ne.s32.totalorder %s19, %s22
    %p28 = scmp.eq.s32.totalorder %s9, 0
    %p29 = por %p27, %p28
    %p30 = scmp.ne.s32.totalorder %s19, %s22
    %p31 = scmp.eq.s32.totalorder %s14, 1
    %p32 = por %p30, %p31
    %p33 = scmp.ne.s32.totalorder %s22, %s23
    %p34 = scmp.eq.s32.totalorder %s14, 0
    %p35 = por %p33, %p34
    %p36 = scmp.ne.s32.totalorder %s22, %s23
    %p37 = scmp.eq.s32.totalorder %s15, 1
    %p38 = por %p36, %p37
    %p40 = scmp.ne.s32.totalorder %s23, %s39
    %p41 = scmp.eq.s32.totalorder %s15, 0
    %p42 = por %p40, %p41
    %s44 = sadd.s32 %s43, 1
    %p47 = scmp.eq.s32.totalorder %s9, 1
    %p48 = scmp.ne.s32.totalorder %s43, %s45
    %p49 = scmp.eq.s32.totalorder %s9, 0
    %p50 = por %p48, %p49
    %p51 = scmp.ne.s32.totalorder %s43, %s45
    %p52 = scmp.eq.s32.totalorder %s14, 1
    %p53 = por %p51, %p52
    %p54 = scmp.ne.s32.totalorder %s45, %s46
    %p55 = scmp.eq.s32.totalorder %s14, 0
    %p56 = por %p54, %p55
    %p57 = scmp.ne.s32.totalorder %s45, %s46
    %p58 = scmp.eq.s32.totalorder %s15, 1
    %p59 = por %p57, %p58
    %p61 = scmp.ne.s32.totalorder %s46, %s60
    %p62 = scmp.eq.s32.totalorder %s15, 0
    %p63 = por %p61, %p62
    %s65 = sadd.s32 %s64, 1
    %p68 = scmp.eq.s32.totalorder %s9, 1
    %p69 = scmp.ne.s32.totalorder %s64, %s66
    %p70 = scmp.eq.s32.totalorder %s9, 0
    %p71 = por %p69, %p70
    %p72 = scmp.ne.s32.totalorder %s64, %s66
    %p73 = scmp.eq.s32.totalorder %s14, 1
    %p74 = por %p72, %p73
    %p75 = scmp.ne.s32.totalorder %s66, %s67
    %p76 = scmp.eq.s32.totalorder %s14, 0
    %p77 = por %p75, %p76
    %p78 = scmp.ne.s32.totalorder %s66, %s67
    %p79 = scmp.eq.s32.totalorder %s15, 1
    %p80 = por %p78, %p79
    %p82 = scmp.ne.s32.totalorder %s67, %s81
    %p83 = scmp.eq.s32.totalorder %s15, 0
    %p84 = por %p82, %p83
    %s85 = ssub.s32 %s9, %s16
    %p86 = scmp.eq.s32.totalorder %s85, 0
    %s88 = sadd.s32 %s87, 1
    %s89 = scalar_select %p86, %s87, %s88
    %p92 = pneg %p86
    %p93 = scmp.eq.s32.totalorder %s9, 1
    %p94 = por %p92, %p93
    %p95 = scmp.ne.s32.totalorder %s87, %s90
    %p96 = scmp.eq.s32.totalorder %s9, 0
    %p97 = por %p95, %p96
    %p98 = scmp.ne.s32.totalorder %s87, %s90
    %p99 = scmp.eq.s32.totalorder %s14, 1
    %p100 = por %p98, %p99
    %p101 = scmp.ne.s32.totalorder %s90, %s91
    %p102 = scmp.eq.s32.totalorder %s14, 0
    %p103 = por %p101, %p102
    %p104 = scmp.ne.s32.totalorder %s90, %s91
    %p105 = scmp.eq.s32.totalorder %s15, 1
    %p106 = por %p104, %p105
    %p108 = scmp.ne.s32.totalorder %s91, %s107
    %p109 = scmp.eq.s32.totalorder %s15, 0
    %p110 = por %p108, %p109
    %p111 = scmp.le.s32.totalorder 1, %s9
    %p112 = scmp.lt.s32.totalorder %s9, 3
    %p113 = pnand %p111, %p112
    %p114 = pneg %p113
    // Predicated region
    $region9: #{tpu_custom_call.1} parent=5 // pred_check
      _
    $region10: #{tpu_custom_call.1} parent=5 // pred_check_branch
      %116 = sbr.rel (%p113) target = $region12
    $region11: #{tpu_custom_call.1} parent=5 // pred_region
      %s117 = ssub.s32 %s9, 1
      // Predicated region
      $region13: #{tpu_custom_call.1} parent=11 // pred_check
        %p118 = pneg %p56
      $region14: #{tpu_custom_call.1} parent=11 // pred_check_branch
        %120 = sbr.rel (%p118) target = $region16
      $region15: #{tpu_custom_call.1} parent=11 // pred_region
        _
      $region16: #{tpu_custom_call.1} parent=11 // pred_fallthru
        _
      // Predicated region
      $region17: #{tpu_custom_call.1} parent=11 // pred_check
        %p121 = pneg %p77
      $region18: #{tpu_custom_call.1} parent=11 // pred_check_branch
        %123 = sbr.rel (%p121) target = $region20
      $region19: #{tpu_custom_call.1} parent=11 // pred_region
        _
      $region20: #{tpu_custom_call.1} parent=11 // pred_fallthru
        _
    $region12: #{tpu_custom_call.1} parent=5 // pred_fallthru
      _
    %p124 = scmp.lt.s32.totalorder %s9, 2
    // Predicated region
    $region21: #{tpu_custom_call.1} parent=5 // pred_check
      %p125 = pneg %p124
    $region22: #{tpu_custom_call.1} parent=5 // pred_check_branch
      %127 = sbr.rel (%p125) target = $region24
    $region23: #{tpu_custom_call.1} parent=5 // pred_region
      // Predicated region
      $region25: #{tpu_custom_call.1} parent=23 // pred_check
        %p128 = pneg %p29
      $region26: #{tpu_custom_call.1} parent=23 // pred_check_branch
        %130 = sbr.rel (%p128) target = $region28
      $region27: #{tpu_custom_call.1} parent=23 // pred_region
        %s131 = smul.u32 2, %s9
        %p132 = scmp.lt.s32.totalorder %s131, 3
        %s133 = scalar_select %p132, %s131, 3
        %s134 = smul.addr %s133, 4
        %s135 = scalar_lea.vmem %s0, %s134
        %s136 = smul.u32 2, %s9
      $region28: #{tpu_custom_call.1} parent=23 // pred_fallthru
        _
    $region24: #{tpu_custom_call.1} parent=5 // pred_fallthru
      _
    %p137 = scmp.le.s32.totalorder 1, %s9
    %p138 = scmp.lt.s32.totalorder %s9, 3
    %p139 = pnand %p137, %p138
    %p140 = pneg %p139
    // Predicated region
    $region29: #{tpu_custom_call.1} parent=5 // pred_check
      _
    $region30: #{tpu_custom_call.1} parent=5 // pred_check_branch
      %142 = sbr.rel (%p139) target = $region32
    $region31: #{tpu_custom_call.1} parent=5 // pred_region
      %s143 = ssub.s32 %s9, 1
      %s144 = smul.u32 2, %s14
      %p145 = scmp.lt.s32.totalorder %s144, 3
      %s146 = scalar_select %p145, %s144, 3
      %s147 = smul.addr %s146, 4
      %s148 = scalar_lea.vmem %s0, %s147
      %p149 = pneg %p35
      %p150 = pneg %p32
      %p151 = pneg %p56
      %p152 = pneg %p53
      %p153 = pneg %p77
      %p154 = pneg %p74
      %p155 = pneg %p103
      %p156 = pneg %p100
      %s157 = smul.u32 2, %s14
      %p158 = scmp.lt.s32.totalorder %s157, 3
      %s159 = scalar_select %p158, %s157, 3
      %s160 = smul.addr %s159, 8
      %s161 = scalar_lea.vmem %s3, %s160
      %s162 = smul.u32 2, %s14
      %p163 = scmp.lt.s32.totalorder %s162, 3
      %s164 = scalar_select %p163, %s162, 3
      %s165 = smul.addr %s164, 4
      %s166 = scalar_lea.vmem %s0, %s165
      %s167 = smul.u32 2, %s14
      %s168 = smul.u32 2, %s14
      %p169 = scmp.lt.s32.totalorder %s168, 3
      %s170 = scalar_select %p169, %s168, 3
      %s171 = smul.addr %s170, 8
      %s172 = scalar_lea.vmem %s3, %s171
      %s173 = smul.u32 2, %s14
      %v175 = vld [vmem:[%s166] sm:$0xf]
      %v176 = vld [vmem:[%s166 + $0x4] sm:$0xf]
      %v177 = vld [vmem:[%s1] sm:$0xf]
      %v178 = vld [vmem:[%s1 + $0x4] sm:$0xf]
      %v179 = vld [vmem:[%s1 + $0x8] sm:$0xf]
      %v180 = vld [vmem:[%s1 + $0xc] sm:$0xf]
      %v181 = vld [vmem:[%s1 + $0x10] sm:$0xf]
      %v182 = vld [vmem:[%s1 + $0x14] sm:$0xf]
      %v183 = vld [vmem:[%s1 + $0x18] sm:$0xf]
      %v184 = vld [vmem:[%s1 + $0x1c] sm:$0xf]
      %v185 = vld [vmem:[%s1 + $0x20] sm:$0xf]
      %v186 = vld [vmem:[%s1 + $0x24] sm:$0xf]
      %v187 = vld [vmem:[%s1 + $0x28] sm:$0xf]
      %v188 = vld [vmem:[%s1 + $0x2c] sm:$0xf]
      %v189 = vld [vmem:[%s1 + $0x30] sm:$0xf]
      %v190 = vld [vmem:[%s1 + $0x34] sm:$0xf]
      %v191 = vld [vmem:[%s1 + $0x38] sm:$0xf]
      %v192 = vld [vmem:[%s1 + $0x3c] sm:$0xf]
      %v193 = vld [vmem:[%s2] sm:$0x1]
      %v195 = vlaneseq
      %v196 = vshrl.u32 %v195, 7
      %v197 = vsub.s32 0, %v196
      %v198 = vrot.slane %v193, %v197
      %v202 = vunpack.c.l.b16 %v175
      %v203 = vunpack.c.l.b16 %v176
      %v204 = vpack.c.b16 %v203, %v202
      %v222 = vunpack.c.l.b16 %v177
      %v223 = vunpack.c.l.b16 %v178
      %v224 = vunpack.c.l.b16 %v179
      %v225 = vunpack.c.l.b16 %v180
      %v226 = vunpack.c.l.b16 %v181
      %v227 = vunpack.c.l.b16 %v182
      %v228 = vunpack.c.l.b16 %v183
      %v229 = vunpack.c.l.b16 %v184
      %v230 = vunpack.c.l.b16 %v185
      %v231 = vunpack.c.l.b16 %v186
      %v232 = vunpack.c.l.b16 %v187
      %v233 = vunpack.c.l.b16 %v188
      %v234 = vunpack.c.l.b16 %v189
      %v235 = vunpack.c.l.b16 %v190
      %v236 = vunpack.c.l.b16 %v191
      %v237 = vunpack.c.l.b16 %v192
      %v238 = vpack.c.b16 %v223, %v222
      %v239 = vpack.c.b16 %v225, %v224
      %v240 = vpack.c.b16 %v227, %v226
      %v241 = vpack.c.b16 %v229, %v228
      %v242 = vpack.c.b16 %v231, %v230
      %v243 = vpack.c.b16 %v233, %v232
      %v244 = vpack.c.b16 %v235, %v234
      %v245 = vpack.c.b16 %v237, %v236
      %254 = vmatprep.subr.bf16.mxu0 0
      %255 = vmatpush1.bf16.msra.mxu0 %v238
      %256 = vmatprep.subr.bf16.mxu0 0
      %257 = vmatpush1.bf16.msra.mxu0 %v239
      %258 = vmatprep.subr.bf16.mxu0 0
      %259 = vmatpush1.bf16.msra.mxu0 %v240
      %260 = vmatprep.subr.bf16.mxu0 0
      %261 = vmatpush1.bf16.msra.mxu0 %v241
      %262 = vmatprep.subr.bf16.mxu0 0
      %263 = vmatpush1.bf16.msra.mxu0 %v242
      %264 = vmatprep.subr.bf16.mxu0 0
      %265 = vmatpush1.bf16.msra.mxu0 %v243
      %266 = vmatprep.subr.bf16.mxu0 0
      %267 = vmatpush1.bf16.msra.mxu0 %v244
      %268 = vmatprep.subr.bf16.mxu0 0
      %269 = vmatpush1.bf16.msra.mxu0 %v245
      %270 = vmatprep.subr.bf16.mxu0 0
      %271 = vmatpush1.bf16.msra.mxu0 0
      %272 = vmatprep.subr.bf16.mxu0 0
      %273 = vmatpush1.bf16.msra.mxu0 0
      %274 = vmatprep.subr.bf16.mxu0 0
      %275 = vmatpush1.bf16.msra.mxu0 0
      %276 = vmatprep.subr.bf16.mxu0 0
      %277 = vmatpush1.bf16.msra.mxu0 0
      %278 = vmatprep.subr.bf16.mxu0 0
      %279 = vmatpush1.bf16.msra.mxu0 0
      %280 = vmatprep.subr.bf16.mxu0 0
      %281 = vmatpush1.bf16.msra.mxu0 0
      %282 = vmatprep.subr.bf16.mxu0 0
      %283 = vmatpush1.bf16.msra.mxu0 0
      %284 = vmatprep.subr.bf16.mxu0 0
      %285 = vmatpush1.bf16.msra.mxu0 0
      %286 = vmatprep.mubr.bf16.mxu0 0
      %287 = vmatmul.mubr.bf16.gmra.mrb[0].mxu0 %v204
      %v288 = vpop.f32.mrb[0].mxu0
      %v289 = vadd.f32 %v198, %v288
      %v290 = vpop.f32.mrb[0].mxu0
      %v291 = vpop.f32.mrb[0].mxu0
      %v292 = vadd.f32 %v198, %v291
      %v293 = vpop.f32.mrb[0].mxu0
      %294 = vdwg.mxu0
      %v295 = vlaneseq
      %v296 = vand.u32 %v295, 127
      %vm297 = vcmask 31744
      %v298 = vsel %vm297, %v289, -inf
      %299 = vmax.xlane.f32.xlu0 %v298
      %v300 = vpop.xlane.xlu0 %299
      %v301 = vsel %vm297, %v292, -inf
      %302 = vmax.xlane.f32.xlu0 %v301
      %v303 = vpop.xlane.xlu0 %302
      %vm304 = vcmp.eq.f32.partialorder %v289, %v300
      %vm305 = vcmp.eq.f32.partialorder %v292, %v303
      %v306 = vsel %vm304, %v296, 4
      %v307 = vsel %vm305, %v296, 4
      %v308 = vsel %vm297, %v306, 2147483647
      %v309 = vand.u32 %v308, 65535
      %v310 = vshra.s32 %v308, 16
      %v311 = vcvt.s32.f32 %v309
      %v312 = vcvt.s32.f32 %v310
      %313 = vmin.xlane.f32.xlu0 %v312
      %v314 = vpop.xlane.xlu0 %313
      %vm315 = vcmp.eq.f32.partialorder %v312, %v314
      %v316 = vsel %vm315, %v311, inf
      %317 = vmin.xlane.f32.xlu0 %v316
      %v318 = vpop.xlane.xlu0 %317
      %v319 = vcvt.f32.s32 %v318
      %v320 = vcvt.f32.s32 %v314
      %v321 = vshll.u32 %v320, 16
      %v322 = vadd.s32 %v321, %v319
      %v323 = vsel %vm297, %v307, 2147483647
      %v324 = vand.u32 %v323, 65535
      %v325 = vshra.s32 %v323, 16
      %v326 = vcvt.s32.f32 %v324
      %v327 = vcvt.s32.f32 %v325
      %328 = vmin.xlane.f32.xlu0 %v327
      %v329 = vpop.xlane.xlu0 %328
      %vm330 = vcmp.eq.f32.partialorder %v327, %v329
      %v331 = vsel %vm330, %v326, inf
      %332 = vmin.xlane.f32.xlu0 %v331
      %v333 = vpop.xlane.xlu0 %332
      %v334 = vcvt.f32.s32 %v333
      %v335 = vcvt.f32.s32 %v329
      %v336 = vshll.u32 %v335, 16
      %v337 = vadd.s32 %v336, %v334
      %vm338 = vcmp.eq.s32.totalorder %v296, %v322
      %vm339 = vcmp.eq.s32.totalorder %v296, %v337
      %v340 = vsel %vm338, -1e+30, %v289
      %v341 = vsel %vm339, -1e+30, %v292
      %v342 = vsel %vm297, %v340, -inf
      %343 = vmax.xlane.f32.xlu0 %v342
      %v344 = vpop.xlane.xlu0 %343
      %v345 = vsel %vm297, %v341, -inf
      %346 = vmax.xlane.f32.xlu0 %v345
      %v347 = vpop.xlane.xlu0 %346
      %vm348 = vcmp.eq.f32.partialorder %v340, %v344
      %vm349 = vcmp.eq.f32.partialorder %v341, %v347
      %v350 = vsel %vm348, %v296, 4
      %v351 = vsel %vm349, %v296, 4
      %v352 = vsel %vm297, %v350, 2147483647
      %v353 = vand.u32 %v352, 65535
      %v354 = vshra.s32 %v352, 16
      %v355 = vcvt.s32.f32 %v353
      %v356 = vcvt.s32.f32 %v354
      %357 = vmin.xlane.f32.xlu0 %v356
      %v358 = vpop.xlane.xlu0 %357
      %vm359 = vcmp.eq.f32.partialorder %v356, %v358
      %v360 = vsel %vm359, %v355, inf
      %361 = vmin.xlane.f32.xlu0 %v360
      %v362 = vpop.xlane.xlu0 %361
      %v363 = vcvt.f32.s32 %v362
      %v364 = vcvt.f32.s32 %v358
      %v365 = vshll.u32 %v364, 16
      %v366 = vadd.s32 %v365, %v363
      %v367 = vsel %vm297, %v351, 2147483647
      %v368 = vand.u32 %v367, 65535
      %v369 = vshra.s32 %v367, 16
      %v370 = vcvt.s32.f32 %v368
      %v371 = vcvt.s32.f32 %v369
      %372 = vmin.xlane.f32.xlu0 %v371
      %v373 = vpop.xlane.xlu0 %372
      %vm374 = vcmp.eq.f32.partialorder %v371, %v373
      %v375 = vsel %vm374, %v370, inf
      %376 = vmin.xlane.f32.xlu0 %v375
      %v377 = vpop.xlane.xlu0 %376
      %v378 = vcvt.f32.s32 %v377
      %v379 = vcvt.f32.s32 %v373
      %v380 = vshll.u32 %v379, 16
      %v381 = vadd.s32 %v380, %v378
      %v382 = vsub.f32 %v344, %v300
      %v383 = vsub.f32 %v347, %v303
      %v384 = vmul.f32 %v382, 1.442695
      %v385 = vpow.pop %v384
      %v386 = vmul.f32 %v383, 1.442695
      %v387 = vpow.pop %v386
      %v388 = vadd.f32 %v385, 1.0
      %v389 = vadd.f32 %v387, 1.0
      %v390 = vrcp.pop %v388
      %v391 = vmul.f32 1.0, %v390
      %v392 = vrcp.pop %v389
      %v393 = vmul.f32 1.0, %v392
      %vm394 = vcmp.eq.s32.totalorder %v296, %v366
      %vm395 = vcmp.eq.s32.totalorder %v296, %v381
      %v396 = vmul.f32 %v385, %v391
      %v397 = vmul.f32 %v387, %v393
      %v398 = vsel %vm394, %v396, 0.0
      %v399 = vsel %vm395, %v397, 0.0
      %v400 = vsel %vm338, %v391, %v398
      %v401 = vsel %vm339, %v393, %v399
      %402 = vst.msk [vmem:[%s172] sm:$0xff] %vm297, %v400
      %403 = vst.msk [vmem:[%s172 + $0x8] sm:$0xff] %vm297, %v401
      %s404 = smul.u32 2, %s14
      %p405 = scmp.lt.s32.totalorder %s404, 3
      %s406 = scalar_select %p405, %s404, 3
      %s407 = smul.addr %s406, 8
      %s408 = scalar_lea.vmem %s3, %s407
      // Predicated region
      $region33: #{tpu_custom_call.1} parent=31 // pred_check
        %p409 = pneg %p100
      $region34: #{tpu_custom_call.1} parent=31 // pred_check_branch
        %411 = sbr.rel (%p409) target = $region36
      $region35: #{tpu_custom_call.1} parent=31 // pred_region
        %s412 = smul.u32 2, %s14
      $region36: #{tpu_custom_call.1} parent=31 // pred_fallthru
        _
    $region32: #{tpu_custom_call.1} parent=5 // pred_fallthru
      _
    %p413 = scmp.le.s32.totalorder 2, %s9
    // Predicated region
    $region37: #{tpu_custom_call.1} parent=5 // pred_check
      %p414 = pneg %p413
    $region38: #{tpu_custom_call.1} parent=5 // pred_check_branch
      %416 = sbr.rel (%p414) target = $region40
    $region39: #{tpu_custom_call.1} parent=5 // pred_region
      %s417 = ssub.s32 %s9, 2
      // Predicated region
      $region41: #{tpu_custom_call.1} parent=39 // pred_check
        %p418 = pneg %p106
      $region42: #{tpu_custom_call.1} parent=39 // pred_check_branch
        %420 = sbr.rel (%p418) target = $region44
      $region43: #{tpu_custom_call.1} parent=39 // pred_region
        %s421 = smul.u32 2, %s15
        %p422 = scmp.lt.s32.totalorder %s421, 3
        %s423 = scalar_select %p422, %s421, 3
        %s424 = smul.addr %s423, 8
        %s425 = scalar_lea.vmem %s3, %s424
      $region44: #{tpu_custom_call.1} parent=39 // pred_fallthru
        _
    $region40: #{tpu_custom_call.1} parent=5 // pred_fallthru
      _
  $region6: #{tpu_custom_call.1} parent=0 // loop_footer
    %s13 = sadd.s32 1, %s9
  $region7: #{tpu_custom_call.1} parent=0 // loop_footer_branch
    %8 = sbr.rel target = $region3
  $region8: #{tpu_custom_call.1} parent=0 // loop_exit
    _

</llo_original>
